<compile_context>
chip_gen: v7x
topology: tpu7x:2x2x1
jax: 0.10.0
libtpu: 0.0.40
codegen_flags: <defaults>
</compile_context>

<pallas_src>
import functools
import math

import jax
import jax.numpy as jnp
from jax.experimental import pallas as pl
from jax.experimental.pallas import tpu as pltpu


def _round_up(v, mult):
    return ((v + mult - 1) // mult) * mult


def _cdiv(a, b):
    return (a + b - 1) // b


# ---------------------------------------------------------------------------
# Kernel body
# ---------------------------------------------------------------------------
def _glu_kernel(x_ref, w_ref, b_ref, o_ref, acc_a_ref, acc_g_ref, *, compute_dtype):
    """acc_a += x @ w[0]; acc_g += x @ w[1];
    at last k: o = (acc_a + b[0]) * sigmoid(acc_g + b[1])."""
    k = pl.program_id(2)

    @pl.when(k == 0)
    def _init():
        acc_a_ref[...] = jnp.zeros_like(acc_a_ref)
        acc_g_ref[...] = jnp.zeros_like(acc_g_ref)

    x = x_ref[...]
    if x.dtype != jnp.dtype(compute_dtype):
        x = x.astype(compute_dtype)          # in-register cast (VPU), no HBM pass
    acc_a_ref[...] += jnp.dot(x, w_ref[0], preferred_element_type=jnp.float32)
    acc_g_ref[...] += jnp.dot(x, w_ref[1], preferred_element_type=jnp.float32)

    @pl.when(k == pl.num_programs(2) - 1)
    def _finalize():
        a = acc_a_ref[...] + b_ref[0]
        g = acc_g_ref[...] + b_ref[1]
        # sigmoid(g) = 0.5 * tanh(0.5 * g) + 0.5  -> single EUP transcendental.
        o_ref[...] = (a * (0.5 * jnp.tanh(0.5 * g) + 0.5)).astype(o_ref.dtype)


# ---------------------------------------------------------------------------
# Sizing helpers
# ---------------------------------------------------------------------------
def _vmem_budget_bytes(frac=0.85):
    try:
        cap = int(pltpu.get_tpu_info().vmem_capacity_bytes)
    except Exception:
        cap = 64 * 1024 * 1024          # conservative fallback (v7x-sized)
    return int(cap * frac)


def _choose_tiles(m, in_size, n_pad, x_item, w_item, out_item,
                  tm_target, tn_target, tk_target, budget):
    # Sublane multiple for the activation tile (8 f32, 16 bf16, 32 int8/fp8).
    sub = 8 * max(1, 4 // max(1, x_item))

    # --- M: biggest tile <= target, minimal last-tile waste, no wrapper pad.
    tm_target = _round_up(max(tm_target, sub), sub)
    if m <= tm_target:
        tm = m                              # single block == full dim (legal)
    else:
        tm = _round_up(_cdiv(m, _cdiv(m, tm_target)), sub)

    # --- N: lane-dense tiles; >=256 when tiled feeds the 256-wide v6e/v7x MXU.
    tn_target = max(256, _round_up(tn_target, 128))
    tn = n_pad if n_pad <= tn_target else tn_target

    # --- K: only tile when it divides exactly (a ragged K tile would add
    #        out-of-bounds garbage into the accumulator).
    tk = in_size
    if in_size > tk_target:
        cand = _round_up(min(tk_target, in_size), 128)
        while cand >= 128:
            if in_size % cand == 0:
                tk = cand
                break
            cand -= 128

    # --- Shrink (tm, tn) until the pipeline footprint fits the VMEM budget.
    def est(tm_, tn_, tk_):
        return (2 * tm_ * tk_ * x_item          # x tiles (double-buffered)
                + 2 * 2 * tk_ * tn_ * w_item    # fused weight tiles
                + 2 * 2 * tn_ * 4               # bias tiles
                + 2 * tm_ * tn_ * out_item      # output tiles (double-buffered)
                + 2 * tm_ * tn_ * 4)            # f32 accumulator scratch

    while est(tm, tn, tk) > budget and (tm > sub or tn > 128):
        if tm >= tn and tm > sub:
            tm = max(sub, _round_up(tm // 2, sub))
        elif tn > 128:
            tn = max(128, _round_up(tn // 2, 128))
        else:
            tm = max(sub, _round_up(tm // 2, sub))
    return tm, tn, tk


# ---------------------------------------------------------------------------
# Param fusion (done ONCE, outside the forward hot path)
# ---------------------------------------------------------------------------
def fuse_glu_params(w1, b1, w2, b2, *, compute_dtype=jnp.bfloat16):
    """Fuse + pad the two Linear layers into MXU-ready arrays.

    w1, w2: [input_size, output_size] (transposed vs. PyTorch's [out, in]).
    Returns (wc [2, K, n_pad] compute_dtype, bc [2, 1, n_pad] f32, out_size).
    Call once at parameter-init time, not per forward call.
    """
    in_size, out_size = w1.shape
    n_pad = _round_up(out_size, 128)
    wc = jnp.zeros((2, in_size, n_pad), dtype=compute_dtype)
    wc = wc.at[0, :, :out_size].set(w1.astype(compute_dtype))
    wc = wc.at[1, :, :out_size].set(w2.astype(compute_dtype))
    bc = jnp.zeros((2, 1, n_pad), dtype=jnp.float32)
    bc = bc.at[0, 0, :out_size].set(b1.astype(jnp.float32))
    bc = bc.at[1, 0, :out_size].set(b2.astype(jnp.float32))
    return wc, bc, out_size


# ---------------------------------------------------------------------------
# Forward
# ---------------------------------------------------------------------------
def glu_forward(x, wc, bc, out_size, *, tm_target=512, tn_target=1024,
                tk_target=2048, single_buffer_weights=True):
    """GLU forward: (x @ w1 + b1) * sigmoid(x @ w2 + b2).

    x:  [..., input_size]
    wc: [2, input_size, n_pad]  fused weights from fuse_glu_params
    bc: [2, 1, n_pad]           fused f32 biases
    returns [..., out_size] in x.dtype.
    """
    in_size = x.shape[-1]
    assert wc.shape[0] == 2 and wc.shape[1] == in_size
    n_pad = wc.shape[2]
    assert bc.shape == (2, 1, n_pad)
    lead = x.shape[:-1]
    m = int(math.prod(lead)) if lead else 1
    out_dtype = x.dtype
    compute_dtype = wc.dtype

    x2d = x.reshape(m, in_size)

    x_item = jnp.dtype(x.dtype).itemsize
    w_item = jnp.dtype(wc.dtype).itemsize
    out_item = jnp.dtype(out_dtype).itemsize

    budget = _vmem_budget_bytes()
    tm, tn, tk = _choose_tiles(m, in_size, n_pad, x_item, w_item, out_item,
                               tm_target, tn_target, tk_target, budget)
    grid_m = _cdiv(m, tm)
    grid_n = _cdiv(n_pad, tn)
    grid_k = max(1, in_size // tk)
    grid = (grid_m, grid_n, grid_k)

    # Single-buffer the resident weight/bias only when their index_map is
    # constant across the whole grid (no re-fetch ever needed).
    single_buffer = single_buffer_weights and grid_n == 1 and grid_k == 1

    kern = functools.partial(_glu_kernel, compute_dtype=compute_dtype)

    def _run(use_single_buffer):
        resident = {"pipeline_mode": pl.Buffered(1)} if use_single_buffer else {}
        grid_spec = pltpu.PrefetchScalarGridSpec(
            num_scalar_prefetch=0,
            grid=grid,
            in_specs=[
                pl.BlockSpec((tm, tk), lambda i, j, k: (i, k)),
                pl.BlockSpec((2, tk, tn), lambda i, j, k: (0, k, j), **resident),
                pl.BlockSpec((2, 1, tn), lambda i, j, k: (0, 0, j), **resident),
            ],
            out_specs=pl.BlockSpec((tm, tn), lambda i, j, k: (i, j)),
            scratch_shapes=[pltpu.VMEM((tm, tn), jnp.float32),
                            pltpu.VMEM((tm, tn), jnp.float32)],
        )
        return pl.pallas_call(
            kern,
            out_shape=jax.ShapeDtypeStruct((m, n_pad), out_dtype),
            grid_spec=grid_spec,
            compiler_params=pltpu.CompilerParams(
                dimension_semantics=("parallel", "parallel", "arbitrary"),
                vmem_limit_bytes=budget,
            ),
        )(x2d, wc, bc)

    if single_buffer:
        try:
            out2d = _run(True)
        except Exception:
            # pl.Buffered(1) not supported by this JAX build -> default buffering.
            out2d = _run(False)
    else:
        out2d = _run(False)

    # Only slice when the feature dim is genuinely ragged (saves an HBM pass
    # when out_size is already a multiple of 128). No M slice is ever needed.
    if n_pad != out_size:
        out2d = out2d[:, :out_size]
    return out2d.reshape(*lead, out_size)


def init_glu_params(key, input_size, output_size, dtype=jnp.float32):
    """Deterministic init mirroring nn.Linear's default (kaiming-uniform-ish)."""
    k1, k2, k3, k4 = jax.random.split(key, 4)
    bound = 1.0 / math.sqrt(input_size)
    # Stored transposed: [input_size, output_size]
    w1 = jax.random.uniform(k1, (input_size, output_size), dtype, -bound, bound)
    b1 = jax.random.uniform(k2, (output_size,), dtype, -bound, bound)
    w2 = jax.random.uniform(k3, (input_size, output_size), dtype, -bound, bound)
    b2 = jax.random.uniform(k4, (output_size,), dtype, -bound, bound)
    return w1, b1, w2, b2


if __name__ == "__main__":
    key = jax.random.PRNGKey(0)
    k_x, k_p = jax.random.split(key)

    # --- Small shapes implied by the module: batch=2, seq=8, hidden=32 -> 32.
    batch, seq, input_size, output_size = 2, 8, 32, 32
    x = jax.random.normal(k_x, (batch, seq, input_size), jnp.float32)
    w1, b1, w2, b2 = init_glu_params(k_p, input_size, output_size)

    with jax.default_matmul_precision("highest"):
        ref = (x @ w1 + b1) * jax.nn.sigmoid(x @ w2 + b2)

    # 1) Default bf16-MXU path (f32 accumulation / epilogue).
    wc_bf16, bc, osz = fuse_glu_params(w1, b1, w2, b2)  # compute_dtype=bf16
    out = jax.block_until_ready(glu_forward(x, wc_bf16, bc, osz))
    assert out.shape == (batch, seq, output_size)
    assert jnp.allclose(out, ref, atol=3e-2, rtol=3e-2)

    # 2) Full-f32 MXU path (tight check of the fused kernel semantics).
    wc_f32, bc_f32, _ = fuse_glu_params(w1, b1, w2, b2, compute_dtype=jnp.float32)
    out32 = jax.block_until_ready(glu_forward(x, wc_f32, bc_f32, osz))
    assert jnp.allclose(out32, ref, atol=5e-3, rtol=5e-3)

    # 3) M-tiled path with a ragged last tile (M=1500, grid_m=3), bf16 default.
    x_big = jax.random.normal(k_x, (6, 250, input_size), jnp.float32)
    with jax.default_matmul_precision("highest"):
        ref_big = (x_big @ w1 + b1) * jax.nn.sigmoid(x_big @ w2 + b2)
    out_big = jax.block_until_ready(glu_forward(x_big, wc_bf16, bc, osz))
    assert out_big.shape == (6, 250, output_size)
    assert jnp.allclose(out_big, ref_big, atol=3e-2, rtol=3e-2)

    # 4) K-tiled accumulator path (in=256, tk=128 -> grid_k=2), f32.
    in2, out2 = 256, 96
    kx2, kp2 = jax.random.split(k_p)
    x2 = jax.random.normal(kx2, (4, 64, in2), jnp.float32)
    w1b, b1b, w2b, b2b = init_glu_params(kp2, in2, out2)
    wcb, bcb, osz2 = fuse_glu_params(w1b, b1b, w2b, b2b, compute_dtype=jnp.float32)
    with jax.default_matmul_precision("highest"):
        ref2 = (x2 @ w1b + b1b) * jax.nn.sigmoid(x2 @ w2b + b2b)
    out2v = jax.block_until_ready(glu_forward(x2, wcb, bcb, osz2, tk_target=128))
    assert out2v.shape == (4, 64, out2)
    assert jnp.allclose(out2v, ref2, atol=5e-3, rtol=5e-3)

    # 5) N-tiled path (out=512, tn=256 -> grid_n=2), f32.
    in3, out3 = 32, 512
    w1c, b1c, w2c, b2c = init_glu_params(kp2, in3, out3)
    wcc, bcc, osz3 = fuse_glu_params(w1c, b1c, w2c, b2c, compute_dtype=jnp.float32)
    x3 = jax.random.normal(kx2, (2, 16, in3), jnp.float32)
    with jax.default_matmul_precision("highest"):
        ref3 = (x3 @ w1c + b1c) * jax.nn.sigmoid(x3 @ w2c + b2c)
    out3v = jax.block_until_ready(glu_forward(x3, wcc, bcc, osz3, tn_target=256))
    assert out3v.shape == (2, 16, out3)
    assert jnp.allclose(out3v, ref3, atol=5e-3, rtol=5e-3)

    print("KERNEL_OK")
</pallas_src>

<mosaic_0001>
module attributes {stable_mosaic.version = 11 : i64} {
  func.func @_glu_kernel(%arg0: i32, %arg1: i32, %arg2: i32, %arg3: memref<16x32xf32, #tpu.memory_space<vmem>>, %arg4: memref<2x32x128xbf16, #tpu.memory_space<vmem>>, %arg5: memref<2x1x128xf32, #tpu.memory_space<vmem>>, %arg6: memref<16x128xf32, #tpu.memory_space<vmem>>, %arg7: memref<16x128xf32, #tpu.memory_space<vmem>>, %arg8: memref<16x128xf32, #tpu.memory_space<vmem>>) attributes {dimension_semantics = [#tpu.dimension_semantics<parallel>, #tpu.dimension_semantics<parallel>, #tpu.dimension_semantics<arbitrary>], iteration_bounds = array<i64: 1, 1, 1>, scalar_prefetch = 0 : i64, scratch_operands = 2 : i64, tpu.core_type = #tpu.core_type<tc>, window_params = [{transform_indices = @transform_0, window_bounds = array<i64: 16, 32>}, {pipeline_mode = #tpu.pipeline_mode<synchronous>, transform_indices = @transform_1, window_bounds = array<i64: 2, 32, 128>}, {pipeline_mode = #tpu.pipeline_mode<synchronous>, transform_indices = @transform_2, window_bounds = array<i64: 2, 1, 128>}, {transform_indices = @transform_3, window_bounds = array<i64: 16, 128>}]} {
    %c0_i32 = arith.constant 0 : i32
    %0 = arith.cmpi eq, %arg2, %c0_i32 : i32
    %1 = arith.extui %0 : i1 to i32
    %c0_i32_0 = arith.constant 0 : i32
    %2 = arith.cmpi ne, %1, %c0_i32_0 : i32
    scf.if %2 {
      %cst_18 = arith.constant 0.000000e+00 : f32
      %20 = vector.broadcast %cst_18 : f32 to vector<16x128xf32>
      %c0_19 = arith.constant 0 : index
      %c0_20 = arith.constant 0 : index
      %21 = vector.load %arg7[%c0_19, %c0_20] : memref<16x128xf32, #tpu.memory_space<vmem>>, vector<16x128xf32>
      tpu.vector_store %arg7[%c0_19, %c0_20], %20 {strides = array<i32>} : memref<16x128xf32, #tpu.memory_space<vmem>>, vector<16x128xf32>,
      %cst_21 = arith.constant 0.000000e+00 : f32
      %22 = vector.broadcast %cst_21 : f32 to vector<16x128xf32>
      %c0_22 = arith.constant 0 : index
      %c0_23 = arith.constant 0 : index
      %23 = vector.load %arg8[%c0_22, %c0_23] : memref<16x128xf32, #tpu.memory_space<vmem>>, vector<16x128xf32>
      tpu.vector_store %arg8[%c0_22, %c0_23], %22 {strides = array<i32>} : memref<16x128xf32, #tpu.memory_space<vmem>>, vector<16x128xf32>,
    } else {
    }
    %c0 = arith.constant 0 : index
    %c0_1 = arith.constant 0 : index
    %3 = vector.load %arg3[%c0, %c0_1] : memref<16x32xf32, #tpu.memory_space<vmem>>, vector<16x32xf32>
    %4 = arith.truncf %3 : vector<16x32xf32> to vector<16x32xbf16>
    %c0_2 = arith.constant 0 : index
    %c0_3 = arith.constant 0 : index
    %5 = vector.load %arg7[%c0_2, %c0_3] : memref<16x128xf32, #tpu.memory_space<vmem>>, vector<16x128xf32>
    %c0_4 = arith.constant 0 : index
    %c0_5 = arith.constant 0 : index
    %c0_6 = arith.constant 0 : index
    %6 = vector.load %arg4[%c0_4, %c0_5, %c0_6] : memref<2x32x128xbf16, #tpu.memory_space<vmem>>, vector<1x32x128xbf16>
    %7 = vector.shape_cast %6 : vector<1x32x128xbf16> to vector<32x128xbf16>
    %cst = arith.constant dense<0.000000e+00> : vector<16x128xf32>
    %8 = tpu.matmul %4, %7, %cst {dimension_numbers = #tpu.dot_dimension_numbers<[1], [0], [0], [1], [0, 0, 1, 1], [], []>} : vector<16x32xbf16>, vector<32x128xbf16>, vector<16x128xf32> -> vector<16x128xf32>
    %9 = arith.addf %5, %8 : vector<16x128xf32>
    %c0_7 = arith.constant 0 : index
    %c0_8 = arith.constant 0 : index
    %10 = vector.load %arg7[%c0_7, %c0_8] : memref<16x128xf32, #tpu.memory_space<vmem>>, vector<16x128xf32>
    tpu.vector_store %arg7[%c0_7, %c0_8], %9 {strides = array<i32>} : memref<16x128xf32, #tpu.memory_space<vmem>>, vector<16x128xf32>,
    %c0_9 = arith.constant 0 : index
    %c0_10 = arith.constant 0 : index
    %11 = vector.load %arg8[%c0_9, %c0_10] : memref<16x128xf32, #tpu.memory_space<vmem>>, vector<16x128xf32>
    %c1 = arith.constant 1 : index
    %c0_11 = arith.constant 0 : index
    %c0_12 = arith.constant 0 : index
    %12 = vector.load %arg4[%c1, %c0_11, %c0_12] : memref<2x32x128xbf16, #tpu.memory_space<vmem>>, vector<1x32x128xbf16>
    %13 = vector.shape_cast %12 : vector<1x32x128xbf16> to vector<32x128xbf16>
    %cst_13 = arith.constant dense<0.000000e+00> : vector<16x128xf32>
    %14 = tpu.matmul %4, %13, %cst_13 {dimension_numbers = #tpu.dot_dimension_numbers<[1], [0], [0], [1], [0, 0, 1, 1], [], []>} : vector<16x32xbf16>, vector<32x128xbf16>, vector<16x128xf32> -> vector<16x128xf32>
    %15 = arith.addf %11, %14 : vector<16x128xf32>
    %c0_14 = arith.constant 0 : index
    %c0_15 = arith.constant 0 : index
    %16 = vector.load %arg8[%c0_14, %c0_15] : memref<16x128xf32, #tpu.memory_space<vmem>>, vector<16x128xf32>
    tpu.vector_store %arg8[%c0_14, %c0_15], %15 {strides = array<i32>} : memref<16x128xf32, #tpu.memory_space<vmem>>, vector<16x128xf32>,
    %c0_i32_16 = arith.constant 0 : i32
    %17 = arith.cmpi eq, %arg2, %c0_i32_16 : i32
    %18 = arith.extui %17 : i1 to i32
    %c0_i32_17 = arith.constant 0 : i32
    %19 = arith.cmpi ne, %18, %c0_i32_17 : i32
    scf.if %19 {
      %c0_18 = arith.constant 0 : index
      %c0_19 = arith.constant 0 : index
      %20 = vector.load %arg7[%c0_18, %c0_19] : memref<16x128xf32, #tpu.memory_space<vmem>>, vector<16x128xf32>
      %c0_20 = arith.constant 0 : index
      %c0_21 = arith.constant 0 : index
      %c0_22 = arith.constant 0 : index
      %21 = vector.load %arg5[%c0_20, %c0_21, %c0_22] : memref<2x1x128xf32, #tpu.memory_space<vmem>>, vector<1x1x128xf32>
      %22 = vector.shape_cast %21 : vector<1x1x128xf32> to vector<1x128xf32>
      %23 = vector.broadcast %22 : vector<1x128xf32> to vector<16x128xf32>
      %24 = arith.addf %20, %23 : vector<16x128xf32>
      %c0_23 = arith.constant 0 : index
      %c0_24 = arith.constant 0 : index
      %25 = vector.load %arg8[%c0_23, %c0_24] : memref<16x128xf32, #tpu.memory_space<vmem>>, vector<16x128xf32>
      %c1_25 = arith.constant 1 : index
      %c0_26 = arith.constant 0 : index
      %c0_27 = arith.constant 0 : index
      %26 = vector.load %arg5[%c1_25, %c0_26, %c0_27] : memref<2x1x128xf32, #tpu.memory_space<vmem>>, vector<1x1x128xf32>
      %27 = vector.shape_cast %26 : vector<1x1x128xf32> to vector<1x128xf32>
      %28 = vector.broadcast %27 : vector<1x128xf32> to vector<16x128xf32>
      %29 = arith.addf %25, %28 : vector<16x128xf32>
      %cst_28 = arith.constant 5.000000e-01 : f32
      %30 = vector.broadcast %cst_28 : f32 to vector<16x128xf32>
      %31 = arith.mulf %30, %29 : vector<16x128xf32>
      %32 = math.tanh %31 : vector<16x128xf32>
      %cst_29 = arith.constant 5.000000e-01 : f32
      %33 = vector.broadcast %cst_29 : f32 to vector<16x128xf32>
      %34 = arith.mulf %33, %32 : vector<16x128xf32>
      %cst_30 = arith.constant 5.000000e-01 : f32
      %35 = vector.broadcast %cst_30 : f32 to vector<16x128xf32>
      %36 = arith.addf %34, %35 : vector<16x128xf32>
      %37 = arith.mulf %24, %36 : vector<16x128xf32>
      %c0_31 = arith.constant 0 : index
      %c0_32 = arith.constant 0 : index
      %38 = vector.load %arg6[%c0_31, %c0_32] : memref<16x128xf32, #tpu.memory_space<vmem>>, vector<16x128xf32>
      tpu.vector_store %arg6[%c0_31, %c0_32], %37 {strides = array<i32>} : memref<16x128xf32, #tpu.memory_space<vmem>>, vector<16x128xf32>,
    } else {
    }
    return
  }
  func.func @transform_0(%arg0: i32, %arg1: i32, %arg2: i32) -> (i32, i32) {
    %c0_i32 = arith.constant 0 : i32
    return %arg0, %arg2 : i32, i32
  }
  func.func @transform_1(%arg0: i32, %arg1: i32, %arg2: i32) -> (i32, i32, i32) {
    %c0_i32 = arith.constant 0 : i32
    %c0_i32_0 = arith.constant 0 : i32
    return %c0_i32, %arg2, %arg1 : i32, i32, i32
  }
  func.func @transform_2(%arg0: i32, %arg1: i32, %arg2: i32) -> (i32, i32, i32) {
    %c0_i32 = arith.constant 0 : i32
    %c0_i32_0 = arith.constant 0 : i32
    %c0_i32_1 = arith.constant 0 : i32
    return %c0_i32, %c0_i32_0, %arg1 : i32, i32, i32
  }
  func.func @transform_3(%arg0: i32, %arg1: i32, %arg2: i32) -> (i32, i32) {
    %c0_i32 = arith.constant 0 : i32
    return %arg0, %arg1 : i32, i32
  }
}

module attributes {stable_mosaic.version = 11 : i64} {
  func.func @_glu_kernel(%arg0: i32, %arg1: i32, %arg2: i32, %arg3: memref<16x32xf32, #tpu.memory_space<vmem>>, %arg4: memref<2x32x128xbf16, #tpu.memory_space<vmem>>, %arg5: memref<2x1x128xf32, #tpu.memory_space<vmem>>, %arg6: memref<16x128xf32, #tpu.memory_space<vmem>>, %arg7: memref<16x128xf32, #tpu.memory_space<vmem>>, %arg8: memref<16x128xf32, #tpu.memory_space<vmem>>) attributes {dimension_semantics = [#tpu.dimension_semantics<parallel>, #tpu.dimension_semantics<parallel>, #tpu.dimension_semantics<arbitrary>], iteration_bounds = array<i64: 1, 1, 1>, scalar_prefetch = 0 : i64, scratch_operands = 2 : i64, tpu.core_type = #tpu.core_type<tc>, window_params = [{transform_indices = @transform_0, window_bounds = array<i64: 16, 32>}, {transform_indices = @transform_1, window_bounds = array<i64: 2, 32, 128>}, {transform_indices = @transform_2, window_bounds = array<i64: 2, 1, 128>}, {transform_indices = @transform_3, window_bounds = array<i64: 16, 128>}]} {
    %c0_i32 = arith.constant 0 : i32
    %0 = arith.cmpi eq, %arg2, %c0_i32 : i32
    %1 = arith.extui %0 : i1 to i32
    %c0_i32_0 = arith.constant 0 : i32
    %2 = arith.cmpi ne, %1, %c0_i32_0 : i32
    scf.if %2 {
      %cst_18 = arith.constant 0.000000e+00 : f32
      %20 = vector.broadcast %cst_18 : f32 to vector<16x128xf32>
      %c0_19 = arith.constant 0 : index
      %c0_20 = arith.constant 0 : index
      %21 = vector.load %arg7[%c0_19, %c0_20] : memref<16x128xf32, #tpu.memory_space<vmem>>, vector<16x128xf32>
      tpu.vector_store %arg7[%c0_19, %c0_20], %20 {strides = array<i32>} : memref<16x128xf32, #tpu.memory_space<vmem>>, vector<16x128xf32>,
      %cst_21 = arith.constant 0.000000e+00 : f32
      %22 = vector.broadcast %cst_21 : f32 to vector<16x128xf32>
      %c0_22 = arith.constant 0 : index
      %c0_23 = arith.constant 0 : index
      %23 = vector.load %arg8[%c0_22, %c0_23] : memref<16x128xf32, #tpu.memory_space<vmem>>, vector<16x128xf32>
      tpu.vector_store %arg8[%c0_22, %c0_23], %22 {strides = array<i32>} : memref<16x128xf32, #tpu.memory_space<vmem>>, vector<16x128xf32>,
    } else {
    }
    %c0 = arith.constant 0 : index
    %c0_1 = arith.constant 0 : index
    %3 = vector.load %arg3[%c0, %c0_1] : memref<16x32xf32, #tpu.memory_space<vmem>>, vector<16x32xf32>
    %4 = arith.truncf %3 : vector<16x32xf32> to vector<16x32xbf16>
    %c0_2 = arith.constant 0 : index
    %c0_3 = arith.constant 0 : index
    %5 = vector.load %arg7[%c0_2, %c0_3] : memref<16x128xf32, #tpu.memory_space<vmem>>, vector<16x128xf32>
    %c0_4 = arith.constant 0 : index
    %c0_5 = arith.constant 0 : index
    %c0_6 = arith.constant 0 : index
    %6 = vector.load %arg4[%c0_4, %c0_5, %c0_6] : memref<2x32x128xbf16, #tpu.memory_space<vmem>>, vector<1x32x128xbf16>
    %7 = vector.shape_cast %6 : vector<1x32x128xbf16> to vector<32x128xbf16>
    %cst = arith.constant dense<0.000000e+00> : vector<16x128xf32>
    %8 = tpu.matmul %4, %7, %cst {dimension_numbers = #tpu.dot_dimension_numbers<[1], [0], [0], [1], [0, 0, 1, 1], [], []>} : vector<16x32xbf16>, vector<32x128xbf16>, vector<16x128xf32> -> vector<16x128xf32>
    %9 = arith.addf %5, %8 : vector<16x128xf32>
    %c0_7 = arith.constant 0 : index
    %c0_8 = arith.constant 0 : index
    %10 = vector.load %arg7[%c0_7, %c0_8] : memref<16x128xf32, #tpu.memory_space<vmem>>, vector<16x128xf32>
    tpu.vector_store %arg7[%c0_7, %c0_8], %9 {strides = array<i32>} : memref<16x128xf32, #tpu.memory_space<vmem>>, vector<16x128xf32>,
    %c0_9 = arith.constant 0 : index
    %c0_10 = arith.constant 0 : index
    %11 = vector.load %arg8[%c0_9, %c0_10] : memref<16x128xf32, #tpu.memory_space<vmem>>, vector<16x128xf32>
    %c1 = arith.constant 1 : index
    %c0_11 = arith.constant 0 : index
    %c0_12 = arith.constant 0 : index
    %12 = vector.load %arg4[%c1, %c0_11, %c0_12] : memref<2x32x128xbf16, #tpu.memory_space<vmem>>, vector<1x32x128xbf16>
    %13 = vector.shape_cast %12 : vector<1x32x128xbf16> to vector<32x128xbf16>
    %cst_13 = arith.constant dense<0.000000e+00> : vector<16x128xf32>
    %14 = tpu.matmul %4, %13, %cst_13 {dimension_numbers = #tpu.dot_dimension_numbers<[1], [0], [0], [1], [0, 0, 1, 1], [], []>} : vector<16x32xbf16>, vector<32x128xbf16>, vector<16x128xf32> -> vector<16x128xf32>
    %15 = arith.addf %11, %14 : vector<16x128xf32>
    %c0_14 = arith.constant 0 : index
    %c0_15 = arith.constant 0 : index
    %16 = vector.load %arg8[%c0_14, %c0_15] : memref<16x128xf32, #tpu.memory_space<vmem>>, vector<16x128xf32>
    tpu.vector_store %arg8[%c0_14, %c0_15], %15 {strides = array<i32>} : memref<16x128xf32, #tpu.memory_space<vmem>>, vector<16x128xf32>,
    %c0_i32_16 = arith.constant 0 : i32
    %17 = arith.cmpi eq, %arg2, %c0_i32_16 : i32
    %18 = arith.extui %17 : i1 to i32
    %c0_i32_17 = arith.constant 0 : i32
    %19 = arith.cmpi ne, %18, %c0_i32_17 : i32
    scf.if %19 {
      %c0_18 = arith.constant 0 : index
      %c0_19 = arith.constant 0 : index
      %20 = vector.load %arg7[%c0_18, %c0_19] : memref<16x128xf32, #tpu.memory_space<vmem>>, vector<16x128xf32>
      %c0_20 = arith.constant 0 : index
      %c0_21 = arith.constant 0 : index
      %c0_22 = arith.constant 0 : index
      %21 = vector.load %arg5[%c0_20, %c0_21, %c0_22] : memref<2x1x128xf32, #tpu.memory_space<vmem>>, vector<1x1x128xf32>
      %22 = vector.shape_cast %21 : vector<1x1x128xf32> to vector<1x128xf32>
      %23 = vector.broadcast %22 : vector<1x128xf32> to vector<16x128xf32>
      %24 = arith.addf %20, %23 : vector<16x128xf32>
      %c0_23 = arith.constant 0 : index
      %c0_24 = arith.constant 0 : index
      %25 = vector.load %arg8[%c0_23, %c0_24] : memref<16x128xf32, #tpu.memory_space<vmem>>, vector<16x128xf32>
      %c1_25 = arith.constant 1 : index
      %c0_26 = arith.constant 0 : index
      %c0_27 = arith.constant 0 : index
      %26 = vector.load %arg5[%c1_25, %c0_26, %c0_27] : memref<2x1x128xf32, #tpu.memory_space<vmem>>, vector<1x1x128xf32>
      %27 = vector.shape_cast %26 : vector<1x1x128xf32> to vector<1x128xf32>
      %28 = vector.broadcast %27 : vector<1x128xf32> to vector<16x128xf32>
      %29 = arith.addf %25, %28 : vector<16x128xf32>
      %cst_28 = arith.constant 5.000000e-01 : f32
      %30 = vector.broadcast %cst_28 : f32 to vector<16x128xf32>
      %31 = arith.mulf %30, %29 : vector<16x128xf32>
      %32 = math.tanh %31 : vector<16x128xf32>
      %cst_29 = arith.constant 5.000000e-01 : f32
      %33 = vector.broadcast %cst_29 : f32 to vector<16x128xf32>
      %34 = arith.mulf %33, %32 : vector<16x128xf32>
      %cst_30 = arith.constant 5.000000e-01 : f32
      %35 = vector.broadcast %cst_30 : f32 to vector<16x128xf32>
      %36 = arith.addf %34, %35 : vector<16x128xf32>
      %37 = arith.mulf %24, %36 : vector<16x128xf32>
      %c0_31 = arith.constant 0 : index
      %c0_32 = arith.constant 0 : index
      %38 = vector.load %arg6[%c0_31, %c0_32] : memref<16x128xf32, #tpu.memory_space<vmem>>, vector<16x128xf32>
      tpu.vector_store %arg6[%c0_31, %c0_32], %37 {strides = array<i32>} : memref<16x128xf32, #tpu.memory_space<vmem>>, vector<16x128xf32>,
    } else {
    }
    return
  }
  func.func @transform_0(%arg0: i32, %arg1: i32, %arg2: i32) -> (i32, i32) {
    %c0_i32 = arith.constant 0 : i32
    return %arg0, %arg2 : i32, i32
  }
  func.func @transform_1(%arg0: i32, %arg1: i32, %arg2: i32) -> (i32, i32, i32) {
    %c0_i32 = arith.constant 0 : i32
    %c0_i32_0 = arith.constant 0 : i32
    return %c0_i32, %arg2, %arg1 : i32, i32, i32
  }
  func.func @transform_2(%arg0: i32, %arg1: i32, %arg2: i32) -> (i32, i32, i32) {
    %c0_i32 = arith.constant 0 : i32
    %c0_i32_0 = arith.constant 0 : i32
    %c0_i32_1 = arith.constant 0 : i32
    return %c0_i32, %c0_i32_0, %arg1 : i32, i32, i32
  }
  func.func @transform_3(%arg0: i32, %arg1: i32, %arg2: i32) -> (i32, i32) {
    %c0_i32 = arith.constant 0 : i32
    return %arg0, %arg1 : i32, i32
  }
}

</mosaic_0001>

<llo_original>
// kernel: tpu_custom_call.1
$region0: #{tpu_custom_call.1}
  #allocation0 [shape = 'u32[]', space=smem, size = 0x4, offset = 0x4, fixed_abs, tag = 'smem constant byte address 0x4 - core index']
  #allocation1 [shape = 'u32[144,128]{1,0:T(1,128)}', space=vmem, size = 0x12000, scoped, tag = 'internal scratch']
  #allocation2 [shape = 'f32[16,128]{1,0:T(8,128)}', space=vmem, size = 0x2000, scoped, tag = 'scratch operand']
  #allocation3 [shape = 'f32[16,128]{1,0:T(8,128)}', space=vmem, size = 0x2000, scoped, tag = 'scratch operand']
  %s0 = inlined_call_operand.hbm [shape: f32[16,32], index: 0, kind: input, shape index: {}]
  %s1 = inlined_call_operand.hbm [shape: bf16[2,32,128], index: 1, kind: input, shape index: {}]
  %s2 = inlined_call_operand.vmem [shape: f32[2,1,128], index: 2, kind: input, shape index: {}]
  %s3 = inlined_call_operand.hbm [shape: f32[16,128], index: 3, kind: output, shape index: {}]
  %s4 = sld [smem:[#allocation0]]
  $region38: #{tpu_custom_call.1} parent=0
    _
  %s6 = ssub.s32 1, %s4
  %s7 = scalar_select 0, %s6, %s4
  $region1: #{tpu_custom_call.1} parent=0
    #allocation4 [shape = 'u8[8192]{0}', space=vmem, size = 0x2000, scoped, tag = 'input window, operand 0, single buffered']
    #allocation5 [shape = 's32[1]{0}', space=sflag, size = 0x4, scoped, tag = 'scoped memory for tpu_custom_call.1']
    #allocation6 [shape = 's32[1]{0}', space=sflag, size = 0x4, scoped, tag = 'scoped memory for tpu_custom_call.1']
    #allocation7 [shape = 'u8[16384]{0}', space=vmem, size = 0x4000, scoped, tag = 'input window, operand 1, single buffered']
    #allocation8 [shape = 's32[1]{0}', space=sflag, size = 0x4, scoped, tag = 'scoped memory for tpu_custom_call.1']
    #allocation9 [shape = 'u8[8192]{0}', space=vmem, size = 0x2000, scoped, tag = 'output window, operand 0, single buffered']
    %8 = vsyncpa [#allocation5], 0
    %9 = vsyncpa [#allocation8], 0
    %10 = vsyncpa [#allocation6], 0
    // Predicated region
    $region2: #{tpu_custom_call.1} parent=1 // pred_check
      _
    $region3: #{tpu_custom_call.1} parent=1 // pred_check_branch
      %12 = sbr.rel (0) target = $region5
    $region4: #{tpu_custom_call.1} parent=1 // pred_region
      %s14 = ssub.s32 256, 256
      %15 = vsyncadd [#allocation5], %s14
      %s16 = sshll.u32 [#allocation4], 4
      %s17 = int_to_ptr.vmem [resolvable:$true] %s16
      %22 = dma.hbm_to_vmem [thread:$0]  %s0, 256, %s17, [#allocation5], 128, 128, 8
    $region5: #{tpu_custom_call.1} parent=1 // pred_fallthru
      _
    // Predicated region
    $region6: #{tpu_custom_call.1} parent=1 // pred_check
      _
    $region7: #{tpu_custom_call.1} parent=1 // pred_check_branch
      %24 = sbr.rel (0) target = $region9
    $region8: #{tpu_custom_call.1} parent=1 // pred_region
      %s26 = ssub.s32 512, 512
      %27 = vsyncadd [#allocation8], %s26
      %s28 = sshll.u32 [#allocation7], 4
      %s29 = int_to_ptr.vmem [resolvable:$true] %s28
      %34 = dma.hbm_to_vmem [thread:$0]  %s1, 512, %s29, [#allocation8], 64, 64, 4
    $region9: #{tpu_custom_call.1} parent=1 // pred_fallthru
      _
    // Predicated region
    $region10: #{tpu_custom_call.1} parent=1 // pred_check
      _
    $region11: #{tpu_custom_call.1} parent=1 // pred_check_branch
      %36 = sbr.rel (0) target = $region13
    $region12: #{tpu_custom_call.1} parent=1 // pred_region
      _
    $region13: #{tpu_custom_call.1} parent=1 // pred_fallthru
      _
    // Predicated region
    $region14: #{tpu_custom_call.1} parent=1 // pred_check
      _
    $region15: #{tpu_custom_call.1} parent=1 // pred_check_branch
      %38 = sbr.rel (0) target = $region17
    $region16: #{tpu_custom_call.1} parent=1 // pred_region
      %39 = dma.done [#allocation5], 256
    $region17: #{tpu_custom_call.1} parent=1 // pred_fallthru
      _
    // Predicated region
    $region18: #{tpu_custom_call.1} parent=1 // pred_check
      _
    $region19: #{tpu_custom_call.1} parent=1 // pred_check_branch
      %41 = sbr.rel (0) target = $region21
    $region20: #{tpu_custom_call.1} parent=1 // pred_region
      %42 = dma.done [#allocation8], 512
    $region21: #{tpu_custom_call.1} parent=1 // pred_fallthru
      _
    %p44 = scmp.eq.s32.totalorder 0, 0
    // Predicated region
    $region22: #{tpu_custom_call.1} parent=1 // pred_check
      %p45 = pneg %p44
    $region23: #{tpu_custom_call.1} parent=1 // pred_check_branch
      %47 = sbr.rel (%p45) target = $region25
    $region24: #{tpu_custom_call.1} parent=1 // pred_region
      %48 = vst [vmem:[#allocation2] sm:$0xff] 0.0
      %49 = vst [vmem:[#allocation2 + $0x8] sm:$0xff] 0.0
      %50 = vst [vmem:[#allocation3] sm:$0xff] 0.0
      %51 = vst [vmem:[#allocation3 + $0x8] sm:$0xff] 0.0
    $region25: #{tpu_custom_call.1} parent=1 // pred_fallthru
      _
    %v52 = vld [vmem:[#allocation4] sm:$0xff]
    %v53 = vld [vmem:[#allocation4 + $0x8] sm:$0xff]
    %v54 = vpack.c.bf16 %v53, %v52
    %v55 = vld [vmem:[#allocation2] sm:$0xff]
    %v56 = vld [vmem:[#allocation2 + $0x8] sm:$0xff]
    %v57 = vld [vmem:[#allocation7] sm:$0xf]
    %v58 = vld [vmem:[#allocation7 + $0x4] sm:$0xf]
    %v59 = vld [vmem:[#allocation7 + $0x8] sm:$0xf]
    %v60 = vld [vmem:[#allocation7 + $0xc] sm:$0xf]
    %v65 = vunpack.c.l.b16 %v57
    %v66 = vunpack.c.l.b16 %v58
    %v67 = vunpack.c.l.b16 %v59
    %v68 = vunpack.c.l.b16 %v60
    %v69 = vpack.c.b16 %v66, %v65
    %v70 = vpack.c.b16 %v68, %v67
    %vm73 = vcmask 261120
    %v75 = vsel %vm73, %v54, 0
    %77 = vmatprep.subr.bf16.mxu0 0
    %78 = vmatpush1.bf16.msra.mxu0 %v69
    %79 = vmatprep.subr.bf16.mxu0 0
    %80 = vmatpush1.bf16.msra.mxu0 %v70
    %81 = vmatprep.subr.bf16.mxu0 0
    %82 = vmatpush1.bf16.msra.mxu0 0
    %83 = vmatprep.subr.bf16.mxu0 0
    %84 = vmatpush1.bf16.msra.mxu0 0
    %85 = vmatprep.subr.bf16.mxu0 0
    %86 = vmatpush1.bf16.msra.mxu0 0
    %87 = vmatprep.subr.bf16.mxu0 0
    %88 = vmatpush1.bf16.msra.mxu0 0
    %89 = vmatprep.subr.bf16.mxu0 0
    %90 = vmatpush1.bf16.msra.mxu0 0
    %91 = vmatprep.subr.bf16.mxu0 0
    %92 = vmatpush1.bf16.msra.mxu0 0
    %93 = vmatprep.subr.bf16.mxu0 0
    %94 = vmatpush1.bf16.msra.mxu0 0
    %95 = vmatprep.subr.bf16.mxu0 0
    %96 = vmatpush1.bf16.msra.mxu0 0
    %97 = vmatprep.subr.bf16.mxu0 0
    %98 = vmatpush1.bf16.msra.mxu0 0
    %99 = vmatprep.subr.bf16.mxu0 0
    %100 = vmatpush1.bf16.msra.mxu0 0
    %101 = vmatprep.subr.bf16.mxu0 0
    %102 = vmatpush1.bf16.msra.mxu0 0
    %103 = vmatprep.subr.bf16.mxu0 0
    %104 = vmatpush1.bf16.msra.mxu0 0
    %105 = vmatprep.subr.bf16.mxu0 0
    %106 = vmatpush1.bf16.msra.mxu0 0
    %107 = vmatprep.subr.bf16.mxu0 0
    %108 = vmatpush1.bf16.msra.mxu0 0
    %109 = vmatprep.mubr.bf16.mxu0 0
    %110 = vmatmul.mubr.bf16.gmra.mrb[0].mxu0 %v75
    %v111 = vpop.f32.mrb[0].mxu0
    %v112 = vadd.f32 0.0, %v111
    %v113 = vpop.f32.mrb[0].mxu0
    %v114 = vpop.f32.mrb[0].mxu0
    %v115 = vadd.f32 0.0, %v114
    %v116 = vpop.f32.mrb[0].mxu0
    %117 = vdwg.mxu0
    %v118 = vadd.f32 %v55, %v112
    %v119 = vadd.f32 %v56, %v115
    %120 = vst [vmem:[#allocation2] sm:$0xff] %v118
    %121 = vst [vmem:[#allocation2 + $0x8] sm:$0xff] %v119
    %v122 = vld [vmem:[#allocation3] sm:$0xff]
    %v123 = vld [vmem:[#allocation3 + $0x8] sm:$0xff]
    %s124 = scalar_lea.vmem [#allocation7], 16
    %v125 = vld [vmem:[%s124] sm:$0xf]
    %v126 = vld [vmem:[%s124 + $0x4] sm:$0xf]
    %v127 = vld [vmem:[%s124 + $0x8] sm:$0xf]
    %v128 = vld [vmem:[%s124 + $0xc] sm:$0xf]
    %v133 = vunpack.c.l.b16 %v125
    %v134 = vunpack.c.l.b16 %v126
    %v135 = vunpack.c.l.b16 %v127
    %v136 = vunpack.c.l.b16 %v128
    %v137 = vpack.c.b16 %v134, %v133
    %v138 = vpack.c.b16 %v136, %v135
    %141 = vmatprep.subr.bf16.mxu0 0
    %142 = vmatpush1.bf16.msra.mxu0 %v137
    %143 = vmatprep.subr.bf16.mxu0 0
    %144 = vmatpush1.bf16.msra.mxu0 %v138
    %145 = vmatprep.subr.bf16.mxu0 0
    %146 = vmatpush1.bf16.msra.mxu0 0
    %147 = vmatprep.subr.bf16.mxu0 0
    %148 = vmatpush1.bf16.msra.mxu0 0
    %149 = vmatprep.subr.bf16.mxu0 0
    %150 = vmatpush1.bf16.msra.mxu0 0
    %151 = vmatprep.subr.bf16.mxu0 0
    %152 = vmatpush1.bf16.msra.mxu0 0
    %153 = vmatprep.subr.bf16.mxu0 0
    %154 = vmatpush1.bf16.msra.mxu0 0
    %155 = vmatprep.subr.bf16.mxu0 0
    %156 = vmatpush1.bf16.msra.mxu0 0
    %157 = vmatprep.subr.bf16.mxu0 0
    %158 = vmatpush1.bf16.msra.mxu0 0
    %159 = vmatprep.subr.bf16.mxu0 0
    %160 = vmatpush1.bf16.msra.mxu0 0
    %161 = vmatprep.subr.bf16.mxu0 0
    %162 = vmatpush1.bf16.msra.mxu0 0
    %163 = vmatprep.subr.bf16.mxu0 0
    %164 = vmatpush1.bf16.msra.mxu0 0
    %165 = vmatprep.subr.bf16.mxu0 0
    %166 = vmatpush1.bf16.msra.mxu0 0
    %167 = vmatprep.subr.bf16.mxu0 0
    %168 = vmatpush1.bf16.msra.mxu0 0
    %169 = vmatprep.subr.bf16.mxu0 0
    %170 = vmatpush1.bf16.msra.mxu0 0
    %171 = vmatprep.subr.bf16.mxu0 0
    %172 = vmatpush1.bf16.msra.mxu0 0
    %173 = vmatprep.mubr.bf16.mxu0 0
    %174 = vmatmul.mubr.bf16.gmra.mrb[0].mxu0 %v75
    %v175 = vpop.f32.mrb[0].mxu0
    %v176 = vadd.f32 0.0, %v175
    %v177 = vpop.f32.mrb[0].mxu0
    %v178 = vpop.f32.mrb[0].mxu0
    %v179 = vadd.f32 0.0, %v178
    %v180 = vpop.f32.mrb[0].mxu0
    %181 = vdwg.mxu0
    %v182 = vadd.f32 %v122, %v176
    %v183 = vadd.f32 %v123, %v179
    %184 = vst [vmem:[#allocation3] sm:$0xff] %v182
    %185 = vst [vmem:[#allocation3 + $0x8] sm:$0xff] %v183
    // Predicated region
    $region26: #{tpu_custom_call.1} parent=1 // pred_check
      %p186 = pneg %p44
    $region27: #{tpu_custom_call.1} parent=1 // pred_check_branch
      %188 = sbr.rel (%p186) target = $region29
    $region28: #{tpu_custom_call.1} parent=1 // pred_region
      %v189 = vld [vmem:[#allocation2] sm:$0xff]
      %v190 = vld [vmem:[#allocation2 + $0x8] sm:$0xff]
      %v191 = vld [vmem:[%s2] sm:$0x1]
      %v193 = vlaneseq
      %v194 = vshrl.u32 %v193, 7
      %v195 = vsub.s32 0, %v194
      %v196 = vrot.slane %v191, %v195
      %v198 = vadd.f32 %v189, %v196
      %v199 = vadd.f32 %v190, %v196
      %v200 = vld [vmem:[#allocation3] sm:$0xff]
      %v201 = vld [vmem:[#allocation3 + $0x8] sm:$0xff]
      %s202 = scalar_lea.vmem %s2, 1
      %v203 = vld [vmem:[%s202] sm:$0x1]
      %v205 = vlaneseq
      %v206 = vshrl.u32 %v205, 7
      %v207 = vsub.s32 0, %v206
      %v208 = vrot.slane %v203, %v207
      %v210 = vadd.f32 %v200, %v208
      %v211 = vadd.f32 %v201, %v208
      %v212 = vmul.f32 %v210, 0.5
      %v213 = vmul.f32 %v211, 0.5
      %v214 = vtanh.pop %v212
      %v215 = vtanh.pop %v213
      %v216 = vmul.f32 %v214, 0.5
      %v217 = vmul.f32 %v215, 0.5
      %v218 = vadd.f32 %v216, 0.5
      %v219 = vadd.f32 %v217, 0.5
      %v220 = vmul.f32 %v198, %v218
      %v221 = vmul.f32 %v199, %v219
      %222 = vst [vmem:[#allocation9] sm:$0xff] %v220
      %223 = vst [vmem:[#allocation9 + $0x8] sm:$0xff] %v221
    $region29: #{tpu_custom_call.1} parent=1 // pred_fallthru
      _
    // Predicated region
    $region30: #{tpu_custom_call.1} parent=1 // pred_check
      _
    $region31: #{tpu_custom_call.1} parent=1 // pred_check_branch
      %225 = sbr.rel (0) target = $region33
    $region32: #{tpu_custom_call.1} parent=1 // pred_region
      %s227 = ssub.s32 256, 256
      %228 = vsyncadd [#allocation6], %s227
      %s229 = sshll.u32 [#allocation9], 4
      %s230 = int_to_ptr.vmem [resolvable:$true] %s229
      %235 = dma.vmem_to_hbm [thread:$0]  %s230, 256, %s3, [#allocation6], 128, 128, 8
    $region33: #{tpu_custom_call.1} parent=1 // pred_fallthru
      _
    // Predicated region
    $region34: #{tpu_custom_call.1} parent=1 // pred_check
      _
    $region35: #{tpu_custom_call.1} parent=1 // pred_check_branch
      %237 = sbr.rel (0) target = $region37
    $region36: #{tpu_custom_call.1} parent=1 // pred_region
      %238 = dma.done [#allocation6], 256
    $region37: #{tpu_custom_call.1} parent=1 // pred_fallthru
      _
    %239 = vsyncpa [#allocation5], 1
    %240 = vsyncpa [#allocation8], 1
    %241 = vsyncpa [#allocation6], 1

// kernel: tpu_custom_call.1
$region0: #{tpu_custom_call.1}
  #allocation0 [shape = 'u32[]', space=smem, size = 0x4, offset = 0x4, fixed_abs, tag = 'smem constant byte address 0x4 - core index']
  #allocation1 [shape = 'u32[144,128]{1,0:T(1,128)}', space=vmem, size = 0x12000, scoped, tag = 'internal scratch']
  #allocation2 [shape = 'f32[16,128]{1,0:T(8,128)}', space=vmem, size = 0x2000, scoped, tag = 'scratch operand']
  #allocation3 [shape = 'f32[16,128]{1,0:T(8,128)}', space=vmem, size = 0x2000, scoped, tag = 'scratch operand']
  %s0 = inlined_call_operand.hbm [shape: f32[16,32], index: 0, kind: input, shape index: {}]
  %s1 = inlined_call_operand.hbm [shape: bf16[2,32,128], index: 1, kind: input, shape index: {}]
  %s2 = inlined_call_operand.vmem [shape: f32[2,1,128], index: 2, kind: input, shape index: {}]
  %s3 = inlined_call_operand.hbm [shape: f32[16,128], index: 3, kind: output, shape index: {}]
  %s4 = sld [smem:[#allocation0]]
  $region38: #{tpu_custom_call.1} parent=0
    _
  %s6 = ssub.s32 1, %s4
  %s7 = scalar_select 0, %s6, %s4
  $region1: #{tpu_custom_call.1} parent=0
    #allocation4 [shape = 'u8[8192]{0}', space=vmem, size = 0x2000, scoped, tag = 'input window, operand 0, single buffered']
    #allocation5 [shape = 's32[1]{0}', space=sflag, size = 0x4, scoped, tag = 'scoped memory for tpu_custom_call.1']
    #allocation6 [shape = 's32[1]{0}', space=sflag, size = 0x4, scoped, tag = 'scoped memory for tpu_custom_call.1']
    #allocation7 [shape = 'u8[16384]{0}', space=vmem, size = 0x4000, scoped, tag = 'input window, operand 1, single buffered']
    #allocation8 [shape = 's32[1]{0}', space=sflag, size = 0x4, scoped, tag = 'scoped memory for tpu_custom_call.1']
    #allocation9 [shape = 'u8[8192]{0}', space=vmem, size = 0x2000, scoped, tag = 'output window, operand 0, single buffered']
    %8 = vsyncpa [#allocation5], 0
    %9 = vsyncpa [#allocation8], 0
    %10 = vsyncpa [#allocation6], 0
    // Predicated region
    $region2: #{tpu_custom_call.1} parent=1 // pred_check
      _
    $region3: #{tpu_custom_call.1} parent=1 // pred_check_branch
      %12 = sbr.rel (0) target = $region5
    $region4: #{tpu_custom_call.1} parent=1 // pred_region
      %s14 = ssub.s32 256, 256
      %15 = vsyncadd [#allocation5], %s14
      %s16 = sshll.u32 [#allocation4], 4
      %s17 = int_to_ptr.vmem [resolvable:$true] %s16
      %22 = dma.hbm_to_vmem [thread:$0]  %s0, 256, %s17, [#allocation5], 128, 128, 8
    $region5: #{tpu_custom_call.1} parent=1 // pred_fallthru
      _
    // Predicated region
    $region6: #{tpu_custom_call.1} parent=1 // pred_check
      _
    $region7: #{tpu_custom_call.1} parent=1 // pred_check_branch
      %24 = sbr.rel (0) target = $region9
    $region8: #{tpu_custom_call.1} parent=1 // pred_region
      %s26 = ssub.s32 512, 512
      %27 = vsyncadd [#allocation8], %s26
      %s28 = sshll.u32 [#allocation7], 4
      %s29 = int_to_ptr.vmem [resolvable:$true] %s28
      %34 = dma.hbm_to_vmem [thread:$0]  %s1, 512, %s29, [#allocation8], 64, 64, 4
    $region9: #{tpu_custom_call.1} parent=1 // pred_fallthru
      _
    // Predicated region
    $region10: #{tpu_custom_call.1} parent=1 // pred_check
      _
    $region11: #{tpu_custom_call.1} parent=1 // pred_check_branch
      %36 = sbr.rel (0) target = $region13
    $region12: #{tpu_custom_call.1} parent=1 // pred_region
      _
    $region13: #{tpu_custom_call.1} parent=1 // pred_fallthru
      _
    // Predicated region
    $region14: #{tpu_custom_call.1} parent=1 // pred_check
      _
    $region15: #{tpu_custom_call.1} parent=1 // pred_check_branch
      %38 = sbr.rel (0) target = $region17
    $region16: #{tpu_custom_call.1} parent=1 // pred_region
      %39 = dma.done [#allocation5], 256
    $region17: #{tpu_custom_call.1} parent=1 // pred_fallthru
      _
    // Predicated region
    $region18: #{tpu_custom_call.1} parent=1 // pred_check
      _
    $region19: #{tpu_custom_call.1} parent=1 // pred_check_branch
      %41 = sbr.rel (0) target = $region21
    $region20: #{tpu_custom_call.1} parent=1 // pred_region
      %42 = dma.done [#allocation8], 512
    $region21: #{tpu_custom_call.1} parent=1 // pred_fallthru
      _
    %p44 = scmp.eq.s32.totalorder 0, 0
    // Predicated region
    $region22: #{tpu_custom_call.1} parent=1 // pred_check
      %p45 = pneg %p44
    $region23: #{tpu_custom_call.1} parent=1 // pred_check_branch
      %47 = sbr.rel (%p45) target = $region25
    $region24: #{tpu_custom_call.1} parent=1 // pred_region
      %48 = vst [vmem:[#allocation2] sm:$0xff] 0.0
      %49 = vst [vmem:[#allocation2 + $0x8] sm:$0xff] 0.0
      %50 = vst [vmem:[#allocation3] sm:$0xff] 0.0
      %51 = vst [vmem:[#allocation3 + $0x8] sm:$0xff] 0.0
    $region25: #{tpu_custom_call.1} parent=1 // pred_fallthru
      _
    %v52 = vld [vmem:[#allocation4] sm:$0xff]
    %v53 = vld [vmem:[#allocation4 + $0x8] sm:$0xff]
    %v54 = vpack.c.bf16 %v53, %v52
    %v55 = vld [vmem:[#allocation2] sm:$0xff]
    %v56 = vld [vmem:[#allocation2 + $0x8] sm:$0xff]
    %v57 = vld [vmem:[#allocation7] sm:$0xf]
    %v58 = vld [vmem:[#allocation7 + $0x4] sm:$0xf]
    %v59 = vld [vmem:[#allocation7 + $0x8] sm:$0xf]
    %v60 = vld [vmem:[#allocation7 + $0xc] sm:$0xf]
    %v65 = vunpack.c.l.b16 %v57
    %v66 = vunpack.c.l.b16 %v58
    %v67 = vunpack.c.l.b16 %v59
    %v68 = vunpack.c.l.b16 %v60
    %v69 = vpack.c.b16 %v66, %v65
    %v70 = vpack.c.b16 %v68, %v67
    %vm73 = vcmask 261120
    %v75 = vsel %vm73, %v54, 0
    %77 = vmatprep.subr.bf16.mxu0 0
    %78 = vmatpush1.bf16.msra.mxu0 %v69
    %79 = vmatprep.subr.bf16.mxu0 0
    %80 = vmatpush1.bf16.msra.mxu0 %v70
    %81 = vmatprep.subr.bf16.mxu0 0
    %82 = vmatpush1.bf16.msra.mxu0 0
    %83 = vmatprep.subr.bf16.mxu0 0
    %84 = vmatpush1.bf16.msra.mxu0 0
    %85 = vmatprep.subr.bf16.mxu0 0
    %86 = vmatpush1.bf16.msra.mxu0 0
    %87 = vmatprep.subr.bf16.mxu0 0
    %88 = vmatpush1.bf16.msra.mxu0 0
    %89 = vmatprep.subr.bf16.mxu0 0
    %90 = vmatpush1.bf16.msra.mxu0 0
    %91 = vmatprep.subr.bf16.mxu0 0
    %92 = vmatpush1.bf16.msra.mxu0 0
    %93 = vmatprep.subr.bf16.mxu0 0
    %94 = vmatpush1.bf16.msra.mxu0 0
    %95 = vmatprep.subr.bf16.mxu0 0
    %96 = vmatpush1.bf16.msra.mxu0 0
    %97 = vmatprep.subr.bf16.mxu0 0
    %98 = vmatpush1.bf16.msra.mxu0 0
    %99 = vmatprep.subr.bf16.mxu0 0
    %100 = vmatpush1.bf16.msra.mxu0 0
    %101 = vmatprep.subr.bf16.mxu0 0
    %102 = vmatpush1.bf16.msra.mxu0 0
    %103 = vmatprep.subr.bf16.mxu0 0
    %104 = vmatpush1.bf16.msra.mxu0 0
    %105 = vmatprep.subr.bf16.mxu0 0
    %106 = vmatpush1.bf16.msra.mxu0 0
    %107 = vmatprep.subr.bf16.mxu0 0
    %108 = vmatpush1.bf16.msra.mxu0 0
    %109 = vmatprep.mubr.bf16.mxu0 0
    %110 = vmatmul.mubr.bf16.gmra.mrb[0].mxu0 %v75
    %v111 = vpop.f32.mrb[0].mxu0
    %v112 = vadd.f32 0.0, %v111
    %v113 = vpop.f32.mrb[0].mxu0
    %v114 = vpop.f32.mrb[0].mxu0
    %v115 = vadd.f32 0.0, %v114
    %v116 = vpop.f32.mrb[0].mxu0
    %117 = vdwg.mxu0
    %v118 = vadd.f32 %v55, %v112
    %v119 = vadd.f32 %v56, %v115
    %120 = vst [vmem:[#allocation2] sm:$0xff] %v118
    %121 = vst [vmem:[#allocation2 + $0x8] sm:$0xff] %v119
    %v122 = vld [vmem:[#allocation3] sm:$0xff]
    %v123 = vld [vmem:[#allocation3 + $0x8] sm:$0xff]
    %s124 = scalar_lea.vmem [#allocation7], 16
    %v125 = vld [vmem:[%s124] sm:$0xf]
    %v126 = vld [vmem:[%s124 + $0x4] sm:$0xf]
    %v127 = vld [vmem:[%s124 + $0x8] sm:$0xf]
    %v128 = vld [vmem:[%s124 + $0xc] sm:$0xf]
    %v133 = vunpack.c.l.b16 %v125
    %v134 = vunpack.c.l.b16 %v126
    %v135 = vunpack.c.l.b16 %v127
    %v136 = vunpack.c.l.b16 %v128
    %v137 = vpack.c.b16 %v134, %v133
    %v138 = vpack.c.b16 %v136, %v135
    %141 = vmatprep.subr.bf16.mxu0 0
    %142 = vmatpush1.bf16.msra.mxu0 %v137
    %143 = vmatprep.subr.bf16.mxu0 0
    %144 = vmatpush1.bf16.msra.mxu0 %v138
    %145 = vmatprep.subr.bf16.mxu0 0
    %146 = vmatpush1.bf16.msra.mxu0 0
    %147 = vmatprep.subr.bf16.mxu0 0
    %148 = vmatpush1.bf16.msra.mxu0 0
    %149 = vmatprep.subr.bf16.mxu0 0
    %150 = vmatpush1.bf16.msra.mxu0 0
    %151 = vmatprep.subr.bf16.mxu0 0
    %152 = vmatpush1.bf16.msra.mxu0 0
    %153 = vmatprep.subr.bf16.mxu0 0
    %154 = vmatpush1.bf16.msra.mxu0 0
    %155 = vmatprep.subr.bf16.mxu0 0
    %156 = vmatpush1.bf16.msra.mxu0 0
    %157 = vmatprep.subr.bf16.mxu0 0
    %158 = vmatpush1.bf16.msra.mxu0 0
    %159 = vmatprep.subr.bf16.mxu0 0
    %160 = vmatpush1.bf16.msra.mxu0 0
    %161 = vmatprep.subr.bf16.mxu0 0
    %162 = vmatpush1.bf16.msra.mxu0 0
    %163 = vmatprep.subr.bf16.mxu0 0
    %164 = vmatpush1.bf16.msra.mxu0 0
    %165 = vmatprep.subr.bf16.mxu0 0
    %166 = vmatpush1.bf16.msra.mxu0 0
    %167 = vmatprep.subr.bf16.mxu0 0
    %168 = vmatpush1.bf16.msra.mxu0 0
    %169 = vmatprep.subr.bf16.mxu0 0
    %170 = vmatpush1.bf16.msra.mxu0 0
    %171 = vmatprep.subr.bf16.mxu0 0
    %172 = vmatpush1.bf16.msra.mxu0 0
    %173 = vmatprep.mubr.bf16.mxu0 0
    %174 = vmatmul.mubr.bf16.gmra.mrb[0].mxu0 %v75
    %v175 = vpop.f32.mrb[0].mxu0
    %v176 = vadd.f32 0.0, %v175
    %v177 = vpop.f32.mrb[0].mxu0
    %v178 = vpop.f32.mrb[0].mxu0
    %v179 = vadd.f32 0.0, %v178
    %v180 = vpop.f32.mrb[0].mxu0
    %181 = vdwg.mxu0
    %v182 = vadd.f32 %v122, %v176
    %v183 = vadd.f32 %v123, %v179
    %184 = vst [vmem:[#allocation3] sm:$0xff] %v182
    %185 = vst [vmem:[#allocation3 + $0x8] sm:$0xff] %v183
    // Predicated region
    $region26: #{tpu_custom_call.1} parent=1 // pred_check
      %p186 = pneg %p44
    $region27: #{tpu_custom_call.1} parent=1 // pred_check_branch
      %188 = sbr.rel (%p186) target = $region29
    $region28: #{tpu_custom_call.1} parent=1 // pred_region
      %v189 = vld [vmem:[#allocation2] sm:$0xff]
      %v190 = vld [vmem:[#allocation2 + $0x8] sm:$0xff]
      %v191 = vld [vmem:[%s2] sm:$0x1]
      %v193 = vlaneseq
      %v194 = vshrl.u32 %v193, 7
      %v195 = vsub.s32 0, %v194
      %v196 = vrot.slane %v191, %v195
      %v198 = vadd.f32 %v189, %v196
      %v199 = vadd.f32 %v190, %v196
      %v200 = vld [vmem:[#allocation3] sm:$0xff]
      %v201 = vld [vmem:[#allocation3 + $0x8] sm:$0xff]
      %s202 = scalar_lea.vmem %s2, 1
      %v203 = vld [vmem:[%s202] sm:$0x1]
      %v205 = vlaneseq
      %v206 = vshrl.u32 %v205, 7
      %v207 = vsub.s32 0, %v206
      %v208 = vrot.slane %v203, %v207
      %v210 = vadd.f32 %v200, %v208
      %v211 = vadd.f32 %v201, %v208
      %v212 = vmul.f32 %v210, 0.5
      %v213 = vmul.f32 %v211, 0.5
      %v214 = vtanh.pop %v212
      %v215 = vtanh.pop %v213
      %v216 = vmul.f32 %v214, 0.5
      %v217 = vmul.f32 %v215, 0.5
      %v218 = vadd.f32 %v216, 0.5
      %v219 = vadd.f32 %v217, 0.5
      %v220 = vmul.f32 %v198, %v218
      %v221 = vmul.f32 %v199, %v219
      %222 = vst [vmem:[#allocation9] sm:$0xff] %v220
      %223 = vst [vmem:[#allocation9 + $0x8] sm:$0xff] %v221
    $region29: #{tpu_custom_call.1} parent=1 // pred_fallthru
      _
    // Predicated region
    $region30: #{tpu_custom_call.1} parent=1 // pred_check
      _
    $region31: #{tpu_custom_call.1} parent=1 // pred_check_branch
      %225 = sbr.rel (0) target = $region33
    $region32: #{tpu_custom_call.1} parent=1 // pred_region
      %s227 = ssub.s32 256, 256
      %228 = vsyncadd [#allocation6], %s227
      %s229 = sshll.u32 [#allocation9], 4
      %s230 = int_to_ptr.vmem [resolvable:$true] %s229
      %235 = dma.vmem_to_hbm [thread:$0]  %s230, 256, %s3, [#allocation6], 128, 128, 8
    $region33: #{tpu_custom_call.1} parent=1 // pred_fallthru
      _
    // Predicated region
    $region34: #{tpu_custom_call.1} parent=1 // pred_check
      _
    $region35: #{tpu_custom_call.1} parent=1 // pred_check_branch
      %237 = sbr.rel (0) target = $region37
    $region36: #{tpu_custom_call.1} parent=1 // pred_region
      %238 = dma.done [#allocation6], 256
    $region37: #{tpu_custom_call.1} parent=1 // pred_fallthru
      _
    %239 = vsyncpa [#allocation5], 1
    %240 = vsyncpa [#allocation8], 1
    %241 = vsyncpa [#allocation6], 1

</llo_original>
